<compile_context>
chip_gen: v7x
topology: tpu7x:2x2x1
jax: 0.10.0
libtpu: 0.0.40
codegen_flags: <defaults>
</compile_context>

<pallas_src>
import functools

import jax
import jax.numpy as jnp
from jax.experimental import pallas as pl
from jax.experimental.pallas import tpu as pltpu

_INT32_MIN = -(2 ** 31)
_INT32_MAX = 2 ** 31 - 1


def _knn_kernel(xq_ref, xc_ref, nsq_ref, idx_ref, state_ref, *,
                k_total: int, idx_bits: int, tk: int, hoisted: bool):
    """One (batch, row-tile, col-tile) grid step of streaming top-k KNN.

    xq_ref:    (1, TM, D)  bf16   query rows for this row tile
    xc_ref:    (1, N, D) or (1, TK, D) bf16   candidate rows (hoisted slab or tile)
    nsq_ref:   (1, N, 1) or (1, TK, 1) f32    -0.5*|x_c|^2 per candidate
    idx_ref:   (1, k_total, TM) int32   neighbor indices (lane-dense, written
                                        only at the last column tile)
    state_ref: (k_pad, TM) int32   running top-k packed keys (VMEM scratch)
    """
    c = pl.program_id(2)
    sentinel = jnp.int32(_INT32_MIN)
    mask = (1 << idx_bits) - 1          # python int; fits int32
    col0 = c * tk                       # global column offset of this tile

    xq = xq_ref[0]                      # (TM, D) bf16
    if hoisted:
        cs = pl.multiple_of(col0, 8)
        xc = xc_ref[0, pl.ds(cs, tk), :]        # (TK, D) bf16
        nsq = nsq_ref[0, pl.ds(cs, tk), :]      # (TK, 1) f32
    else:
        xc = xc_ref[0]
        nsq = nsq_ref[0]

    # Gram term on the MXU in bf16 (f32 accumulate).  Ranking metric:
    #   score = <x_c, x_q> - 0.5*|x_c|^2   (row-constant |x_q|^2 dropped,
    # positive scale folded; per-row top-k ranking is invariant to both).
    # Candidates on sublanes, queries on lanes -> reductions below run along
    # sublanes and the output store is lane-dense.
    xx = jax.lax.dot_general(xc, xq, (((1,), (1,)), ((), ())),
                             preferred_element_type=jnp.float32)   # (TK, TM)
    score = xx + nsq                                               # (TK, TM)

    # Pack (score, global column index) into one order-preserving int32 key:
    #   high bits = monotone-mapped f32 bits (low `idx_bits` bits cleared)
    #   low  bits = mask - global_col  (ties break toward smaller index)
    s_bits = pltpu.bitcast(score, jnp.int32)
    mono = jnp.where(s_bits < 0, s_bits ^ _INT32_MAX, s_bits)
    rev_col = (mask - col0) - jax.lax.broadcasted_iota(jnp.int32, (tk, 1), 0)
    key = (mono & (~mask)) | rev_col                               # (TK, TM)

    @pl.when(c == 0)
    def _():
        state_ref[...] = jnp.full(state_ref.shape, sentinel, dtype=jnp.int32)

    state = state_ref[...]                                         # (k_pad, TM)
    tm = xq_ref.shape[1]

    # Store-free selection scan: packed keys are unique per query column, so
    # the i-th largest of union(state, key) is the max element strictly below
    # the previous max.  Neither `key` nor `state` is ever rewritten.
    prev = jnp.full((1, tm), jnp.int32(_INT32_MAX), dtype=jnp.int32)
    rows = []
    for _ in range(k_total):
        a = jnp.max(jnp.where(key < prev, key, sentinel), axis=0, keepdims=True)
        b = jnp.max(jnp.where(state < prev, state, sentinel), axis=0,
                    keepdims=True)
        m = jnp.maximum(a, b)                                      # (1, TM)
        rows.append(m)
        prev = m

    k_pad = state_ref.shape[0]
    if k_pad > k_total:
        rows.append(jnp.full((k_pad - k_total, tm), sentinel, dtype=jnp.int32))
    new_state = jnp.concatenate(rows, axis=0)                      # (k_pad, TM)
    state_ref[...] = new_state                                     # one store

    @pl.when(c == pl.num_programs(2) - 1)
    def _():
        idx_ref[0] = mask - (new_state[:k_total] & mask)           # lane-dense


def _pick_tile(n: int, target: int, align: int) -> int:
    """Largest divisor of n that is a multiple of `align` and <= target;
    falls back to n (full extent, exempt from the (8,128) rule)."""
    if n <= target:
        return n
    t = (target // align) * align
    while t >= align:
        if n % t == 0:
            return t
        t -= align
    return n


def _vmem_limit_bytes() -> int:
    """~75% of physical per-core VMEM: ~96 MiB on v5e/v6e, ~48 MiB on v7x."""
    cap = None
    try:
        cap = getattr(pltpu.get_tpu_info(), "vmem_capacity_bytes", None)
    except Exception:
        cap = None
    if not cap:
        cap = 64 * 1024 * 1024
    return int(cap * 3 // 4)


def _knn_indices(xb_f32, k_total):
    """xb_f32: (B, N, D) f32 -> local nn indices (B, N, k_total) int32."""
    B, N, D = xb_f32.shape
    x_bf16 = xb_f32.astype(jnp.bfloat16)                           # cast once
    nsq = -0.5 * jnp.sum(xb_f32 * xb_f32, axis=-1, keepdims=True)  # (B,N,1) f32

    # Row (query) tile: lanes of the output -> multiple of 128 (or full N).
    # Column (candidate) tile: sublanes of the score slab -> multiple of 8.
    tm_target = 512
    if B == 1:  # keep >= 2 row blocks so a 2-TC chip (v7x) has parallel work
        tm_target = min(tm_target, max(128, N // 2))
    tm = _pick_tile(N, tm_target, 128)
    tk = _pick_tile(N, 1024, 8)
    assert tk >= k_total, "column tile must hold at least k*dilation candidates"
    k_pad = -(-k_total // 8) * 8
    idx_bits = max(1, (N - 1).bit_length())

    # Hoist candidates (+ norms) into VMEM once per batch when the
    # double-buffered slab comfortably fits the smallest (v7x) VMEM budget.
    hoisted = 2 * (N * D * 2 + N * 4) <= 16 * 1024 * 1024
    if hoisted:
        cand_spec = pl.BlockSpec((1, N, D), lambda b, r, c: (b, 0, 0))
        nsq_spec = pl.BlockSpec((1, N, 1), lambda b, r, c: (b, 0, 0))
    else:
        cand_spec = pl.BlockSpec((1, tk, D), lambda b, r, c: (b, c, 0))
        nsq_spec = pl.BlockSpec((1, tk, 1), lambda b, r, c: (b, c, 0))

    kernel = functools.partial(_knn_kernel, k_total=k_total, idx_bits=idx_bits,
                               tk=tk, hoisted=hoisted)
    out = pl.pallas_call(
        kernel,
        out_shape=jax.ShapeDtypeStruct((B, k_total, N), jnp.int32),
        grid_spec=pltpu.PrefetchScalarGridSpec(
            num_scalar_prefetch=0,
            grid=(B, N // tm, N // tk),
            in_specs=[
                pl.BlockSpec((1, tm, D), lambda b, r, c: (b, r, 0)),  # queries
                cand_spec,                                            # candidates
                nsq_spec,                                             # -0.5|x|^2
            ],
            out_specs=pl.BlockSpec((1, k_total, tm), lambda b, r, c: (b, 0, r)),
            scratch_shapes=[pltpu.VMEM((k_pad, tm), jnp.int32)],
        ),
        compiler_params=pltpu.CompilerParams(
            dimension_semantics=("parallel", "parallel", "arbitrary"),
            vmem_limit_bytes=_vmem_limit_bytes(),
        ),
    )(x_bf16, x_bf16, nsq)
    # (B, k_total, N) -> (B, N, k_total) to match torch's nn_idx layout.
    return jnp.transpose(out, (0, 2, 1))


def dilated_knn_graph(x, batch=None, k=4, dilation=2, stochastic=False,
                      epsilon=0.0, batch_size=None):
    """Equivalent of DilatedKnnGraph(k, dilation).forward(x, batch).

    x:          (num_points, num_dims) float32
    batch:      (num_points,) int32 sorted batch ids (equal-sized batches)
    batch_size: pass explicitly to avoid a device->host sync.
    returns edge_index: (2, num_points * k) int32
    """
    # TODO(synk): stochastic/epsilon branch (training-time random dilation) not
    # implemented; default eval path (plain ::dilation slice) is reproduced.
    del stochastic, epsilon

    if batch_size is None:
        batch_size = 1 if batch is None else int(batch[-1]) + 1  # host sync fallback
    num_points, _ = x.shape
    n = num_points // batch_size
    k_total = k * dilation

    xb = x.astype(jnp.float32).reshape(batch_size, n, -1)

    nn_idx = _knn_indices(xb, k_total)                               # (B, n, k*d)

    # Offset local indices into global (flattened-over-batch) point ids.
    start_idx = (jnp.arange(batch_size, dtype=jnp.int32) * n).reshape(
        batch_size, 1, 1)
    nn_idx = nn_idx + start_idx
    nn_flat = nn_idx.reshape(1, -1)                                  # (1, B*n*k*d)

    center_idx = jnp.repeat(
        jnp.arange(n * batch_size, dtype=jnp.int32), k_total).reshape(1, -1)

    edge_index = jnp.concatenate([nn_flat, center_idx], axis=0)      # (2, B*n*k*d)

    # Dilated: edge_index[:, ::dilation]
    return edge_index[:, ::dilation]


if __name__ == "__main__":
    key = jax.random.PRNGKey(0)
    batch_size, n_per_batch, dims = 2, 32, 16
    k, dilation = 4, 2

    num_points = batch_size * n_per_batch
    x = jax.random.normal(key, (num_points, dims), dtype=jnp.float32)
    batch = jnp.repeat(jnp.arange(batch_size, dtype=jnp.int32), n_per_batch)

    fn = jax.jit(dilated_knn_graph,
                 static_argnames=("k", "dilation", "stochastic", "epsilon",
                                  "batch_size"))
    edge_index = fn(x, batch, k=k, dilation=dilation, batch_size=batch_size)
    edge_index = jax.block_until_ready(edge_index)

    assert edge_index.shape == (2, num_points * k), edge_index.shape
    # neighbors must come from the center's own batch
    assert bool(jnp.all(edge_index[0, :] // n_per_batch
                        == edge_index[1, :] // n_per_batch))
    # each point's nearest neighbor is itself (huge margin vs bf16 error)
    assert bool(jnp.all(edge_index[0, ::k] == edge_index[1, ::k]))
    print("KERNEL_OK")
</pallas_src>

<mosaic_0001>
module attributes {stable_mosaic.version = 11 : i64} {
  func.func @_knn_kernel(%arg0: i32, %arg1: i32, %arg2: i32, %arg3: memref<1x32x16xbf16, #tpu.memory_space<vmem>>, %arg4: memref<1x32x16xbf16, #tpu.memory_space<vmem>>, %arg5: memref<1x32x1xf32, #tpu.memory_space<vmem>>, %arg6: memref<1x8x32xi32, #tpu.memory_space<vmem>>, %arg7: memref<8x32xi32, #tpu.memory_space<vmem>>) attributes {dimension_semantics = [#tpu.dimension_semantics<parallel>, #tpu.dimension_semantics<parallel>, #tpu.dimension_semantics<arbitrary>], iteration_bounds = array<i64: 2, 1, 1>, scalar_prefetch = 0 : i64, scratch_operands = 1 : i64, tpu.core_type = #tpu.core_type<tc>, window_params = [{transform_indices = @transform_0, window_bounds = array<i64: 1, 32, 16>}, {transform_indices = @transform_1, window_bounds = array<i64: 1, 32, 16>}, {transform_indices = @transform_2, window_bounds = array<i64: 1, 32, 1>}, {transform_indices = @transform_3, window_bounds = array<i64: 1, 8, 32>}]} {
    %c32_i32 = arith.constant 32 : i32
    %0 = arith.muli %arg2, %c32_i32 : i32
    %c0 = arith.constant 0 : index
    %c0_0 = arith.constant 0 : index
    %c0_1 = arith.constant 0 : index
    %1 = vector.load %arg3[%c0, %c0_0, %c0_1] : memref<1x32x16xbf16, #tpu.memory_space<vmem>>, vector<1x32x16xbf16>
    %2 = vector.shape_cast %1 : vector<1x32x16xbf16> to vector<32x16xbf16>
    %3 = tpu.assume_multiple %0, 8 : i32
    %c0_2 = arith.constant 0 : index
    %4 = arith.index_cast %3 : i32 to index
    %c0_3 = arith.constant 0 : index
    %5 = vector.load %arg4[%c0_2, %4, %c0_3] : memref<1x32x16xbf16, #tpu.memory_space<vmem>>, vector<1x32x16xbf16>
    %6 = vector.shape_cast %5 : vector<1x32x16xbf16> to vector<32x16xbf16>
    %c0_4 = arith.constant 0 : index
    %7 = arith.index_cast %3 : i32 to index
    %c0_5 = arith.constant 0 : index
    %8 = vector.load %arg5[%c0_4, %7, %c0_5] : memref<1x32x1xf32, #tpu.memory_space<vmem>>, vector<1x32x1xf32>
    %9 = vector.shape_cast %8 : vector<1x32x1xf32> to vector<32x1xf32>
    %cst = arith.constant dense<0.000000e+00> : vector<32x32xf32>
    %10 = tpu.matmul %6, %2, %cst {dimension_numbers = #tpu.dot_dimension_numbers<[1], [1], [0], [0], [0, 0, 1, 0], [], []>} : vector<32x16xbf16>, vector<32x16xbf16>, vector<32x32xf32> -> vector<32x32xf32>
    %11 = vector.broadcast %9 : vector<32x1xf32> to vector<32x32xf32>
    %12 = arith.addf %10, %11 : vector<32x32xf32>
    %13 = tpu.bitcast %12 : vector<32x32xf32> -> vector<32x32xi32>
    %c0_i32 = arith.constant 0 : i32
    %14 = vector.broadcast %c0_i32 : i32 to vector<32x32xi32>
    %15 = arith.cmpi slt, %13, %14 : vector<32x32xi32>
    %c2147483647_i32 = arith.constant 2147483647 : i32
    %16 = vector.broadcast %c2147483647_i32 : i32 to vector<32x32xi32>
    %17 = arith.xori %13, %16 : vector<32x32xi32>
    %18 = arith.select %15, %17, %13 : vector<32x32xi1>, vector<32x32xi32>
    %c31_i32 = arith.constant 31 : i32
    %19 = arith.subi %c31_i32, %0 : i32
    %20 = tpu.iota {dimensions = array<i32: 0>} : vector<32x1xi32>
    %21 = vector.broadcast %19 : i32 to vector<32x1xi32>
    %22 = arith.subi %21, %20 : vector<32x1xi32>
    %c-32_i32 = arith.constant -32 : i32
    %23 = vector.broadcast %c-32_i32 : i32 to vector<32x32xi32>
    %24 = arith.andi %18, %23 : vector<32x32xi32>
    %25 = vector.broadcast %22 : vector<32x1xi32> to vector<32x32xi32>
    %26 = arith.ori %24, %25 : vector<32x32xi32>
    %c0_i32_6 = arith.constant 0 : i32
    %27 = arith.cmpi eq, %arg2, %c0_i32_6 : i32
    %28 = arith.extui %27 : i1 to i32
    %c-2147483648_i32 = arith.constant -2147483648 : i32
    %c0_i32_7 = arith.constant 0 : i32
    %29 = arith.cmpi ne, %28, %c0_i32_7 : i32
    scf.if %29 {
      %141 = vector.broadcast %c-2147483648_i32 : i32 to vector<8x32xi32>
      %c0_47 = arith.constant 0 : index
      %c0_48 = arith.constant 0 : index
      %142 = vector.load %arg7[%c0_47, %c0_48] : memref<8x32xi32, #tpu.memory_space<vmem>>, vector<8x32xi32>
      tpu.vector_store %arg7[%c0_47, %c0_48], %141 {strides = array<i32>} : memref<8x32xi32, #tpu.memory_space<vmem>>, vector<8x32xi32>,
    } else {
    }
    %c0_8 = arith.constant 0 : index
    %c0_9 = arith.constant 0 : index
    %30 = vector.load %arg7[%c0_8, %c0_9] : memref<8x32xi32, #tpu.memory_space<vmem>>, vector<8x32xi32>
    %c2147483647_i32_10 = arith.constant 2147483647 : i32
    %31 = vector.broadcast %c2147483647_i32_10 : i32 to vector<1x32xi32>
    %32 = vector.broadcast %31 : vector<1x32xi32> to vector<32x32xi32>
    %33 = arith.cmpi slt, %26, %32 : vector<32x32xi32>
    %c-2147483648_i32_11 = arith.constant -2147483648 : i32
    %34 = vector.broadcast %c-2147483648_i32_11 : i32 to vector<32x32xi32>
    %35 = arith.select %33, %26, %34 : vector<32x32xi1>, vector<32x32xi32>
    %cst_12 = arith.constant dense<-2147483648> : vector<32xi32>
    %36 = vector.multi_reduction <maxsi>, %35, %cst_12 [0] : vector<32x32xi32> to vector<32xi32>
    %37 = vector.shape_cast %36 : vector<32xi32> to vector<1x32xi32>
    %38 = vector.broadcast %31 : vector<1x32xi32> to vector<8x32xi32>
    %39 = arith.cmpi slt, %30, %38 : vector<8x32xi32>
    %c-2147483648_i32_13 = arith.constant -2147483648 : i32
    %40 = vector.broadcast %c-2147483648_i32_13 : i32 to vector<8x32xi32>
    %41 = arith.select %39, %30, %40 : vector<8x32xi1>, vector<8x32xi32>
    %cst_14 = arith.constant dense<-2147483648> : vector<32xi32>
    %42 = vector.multi_reduction <maxsi>, %41, %cst_14 [0] : vector<8x32xi32> to vector<32xi32>
    %43 = vector.shape_cast %42 : vector<32xi32> to vector<1x32xi32>
    %44 = arith.maxsi %37, %43 : vector<1x32xi32>
    %45 = vector.broadcast %44 : vector<1x32xi32> to vector<32x32xi32>
    %46 = arith.cmpi slt, %26, %45 : vector<32x32xi32>
    %c-2147483648_i32_15 = arith.constant -2147483648 : i32
    %47 = vector.broadcast %c-2147483648_i32_15 : i32 to vector<32x32xi32>
    %48 = arith.select %46, %26, %47 : vector<32x32xi1>, vector<32x32xi32>
    %cst_16 = arith.constant dense<-2147483648> : vector<32xi32>
    %49 = vector.multi_reduction <maxsi>, %48, %cst_16 [0] : vector<32x32xi32> to vector<32xi32>
    %50 = vector.shape_cast %49 : vector<32xi32> to vector<1x32xi32>
    %51 = vector.broadcast %44 : vector<1x32xi32> to vector<8x32xi32>
    %52 = arith.cmpi slt, %30, %51 : vector<8x32xi32>
    %c-2147483648_i32_17 = arith.constant -2147483648 : i32
    %53 = vector.broadcast %c-2147483648_i32_17 : i32 to vector<8x32xi32>
    %54 = arith.select %52, %30, %53 : vector<8x32xi1>, vector<8x32xi32>
    %cst_18 = arith.constant dense<-2147483648> : vector<32xi32>
    %55 = vector.multi_reduction <maxsi>, %54, %cst_18 [0] : vector<8x32xi32> to vector<32xi32>
    %56 = vector.shape_cast %55 : vector<32xi32> to vector<1x32xi32>
    %57 = arith.maxsi %50, %56 : vector<1x32xi32>
    %58 = vector.broadcast %57 : vector<1x32xi32> to vector<32x32xi32>
    %59 = arith.cmpi slt, %26, %58 : vector<32x32xi32>
    %c-2147483648_i32_19 = arith.constant -2147483648 : i32
    %60 = vector.broadcast %c-2147483648_i32_19 : i32 to vector<32x32xi32>
    %61 = arith.select %59, %26, %60 : vector<32x32xi1>, vector<32x32xi32>
    %cst_20 = arith.constant dense<-2147483648> : vector<32xi32>
    %62 = vector.multi_reduction <maxsi>, %61, %cst_20 [0] : vector<32x32xi32> to vector<32xi32>
    %63 = vector.shape_cast %62 : vector<32xi32> to vector<1x32xi32>
    %64 = vector.broadcast %57 : vector<1x32xi32> to vector<8x32xi32>
    %65 = arith.cmpi slt, %30, %64 : vector<8x32xi32>
    %c-2147483648_i32_21 = arith.constant -2147483648 : i32
    %66 = vector.broadcast %c-2147483648_i32_21 : i32 to vector<8x32xi32>
    %67 = arith.select %65, %30, %66 : vector<8x32xi1>, vector<8x32xi32>
    %cst_22 = arith.constant dense<-2147483648> : vector<32xi32>
    %68 = vector.multi_reduction <maxsi>, %67, %cst_22 [0] : vector<8x32xi32> to vector<32xi32>
    %69 = vector.shape_cast %68 : vector<32xi32> to vector<1x32xi32>
    %70 = arith.maxsi %63, %69 : vector<1x32xi32>
    %71 = vector.broadcast %70 : vector<1x32xi32> to vector<32x32xi32>
    %72 = arith.cmpi slt, %26, %71 : vector<32x32xi32>
    %c-2147483648_i32_23 = arith.constant -2147483648 : i32
    %73 = vector.broadcast %c-2147483648_i32_23 : i32 to vector<32x32xi32>
    %74 = arith.select %72, %26, %73 : vector<32x32xi1>, vector<32x32xi32>
    %cst_24 = arith.constant dense<-2147483648> : vector<32xi32>
    %75 = vector.multi_reduction <maxsi>, %74, %cst_24 [0] : vector<32x32xi32> to vector<32xi32>
    %76 = vector.shape_cast %75 : vector<32xi32> to vector<1x32xi32>
    %77 = vector.broadcast %70 : vector<1x32xi32> to vector<8x32xi32>
    %78 = arith.cmpi slt, %30, %77 : vector<8x32xi32>
    %c-2147483648_i32_25 = arith.constant -2147483648 : i32
    %79 = vector.broadcast %c-2147483648_i32_25 : i32 to vector<8x32xi32>
    %80 = arith.select %78, %30, %79 : vector<8x32xi1>, vector<8x32xi32>
    %cst_26 = arith.constant dense<-2147483648> : vector<32xi32>
    %81 = vector.multi_reduction <maxsi>, %80, %cst_26 [0] : vector<8x32xi32> to vector<32xi32>
    %82 = vector.shape_cast %81 : vector<32xi32> to vector<1x32xi32>
    %83 = arith.maxsi %76, %82 : vector<1x32xi32>
    %84 = vector.broadcast %83 : vector<1x32xi32> to vector<32x32xi32>
    %85 = arith.cmpi slt, %26, %84 : vector<32x32xi32>
    %c-2147483648_i32_27 = arith.constant -2147483648 : i32
    %86 = vector.broadcast %c-2147483648_i32_27 : i32 to vector<32x32xi32>
    %87 = arith.select %85, %26, %86 : vector<32x32xi1>, vector<32x32xi32>
    %cst_28 = arith.constant dense<-2147483648> : vector<32xi32>
    %88 = vector.multi_reduction <maxsi>, %87, %cst_28 [0] : vector<32x32xi32> to vector<32xi32>
    %89 = vector.shape_cast %88 : vector<32xi32> to vector<1x32xi32>
    %90 = vector.broadcast %83 : vector<1x32xi32> to vector<8x32xi32>
    %91 = arith.cmpi slt, %30, %90 : vector<8x32xi32>
    %c-2147483648_i32_29 = arith.constant -2147483648 : i32
    %92 = vector.broadcast %c-2147483648_i32_29 : i32 to vector<8x32xi32>
    %93 = arith.select %91, %30, %92 : vector<8x32xi1>, vector<8x32xi32>
    %cst_30 = arith.constant dense<-2147483648> : vector<32xi32>
    %94 = vector.multi_reduction <maxsi>, %93, %cst_30 [0] : vector<8x32xi32> to vector<32xi32>
    %95 = vector.shape_cast %94 : vector<32xi32> to vector<1x32xi32>
    %96 = arith.maxsi %89, %95 : vector<1x32xi32>
    %97 = vector.broadcast %96 : vector<1x32xi32> to vector<32x32xi32>
    %98 = arith.cmpi slt, %26, %97 : vector<32x32xi32>
    %c-2147483648_i32_31 = arith.constant -2147483648 : i32
    %99 = vector.broadcast %c-2147483648_i32_31 : i32 to vector<32x32xi32>
    %100 = arith.select %98, %26, %99 : vector<32x32xi1>, vector<32x32xi32>
    %cst_32 = arith.constant dense<-2147483648> : vector<32xi32>
    %101 = vector.multi_reduction <maxsi>, %100, %cst_32 [0] : vector<32x32xi32> to vector<32xi32>
    %102 = vector.shape_cast %101 : vector<32xi32> to vector<1x32xi32>
    %103 = vector.broadcast %96 : vector<1x32xi32> to vector<8x32xi32>
    %104 = arith.cmpi slt, %30, %103 : vector<8x32xi32>
    %c-2147483648_i32_33 = arith.constant -2147483648 : i32
    %105 = vector.broadcast %c-2147483648_i32_33 : i32 to vector<8x32xi32>
    %106 = arith.select %104, %30, %105 : vector<8x32xi1>, vector<8x32xi32>
    %cst_34 = arith.constant dense<-2147483648> : vector<32xi32>
    %107 = vector.multi_reduction <maxsi>, %106, %cst_34 [0] : vector<8x32xi32> to vector<32xi32>
    %108 = vector.shape_cast %107 : vector<32xi32> to vector<1x32xi32>
    %109 = arith.maxsi %102, %108 : vector<1x32xi32>
    %110 = vector.broadcast %109 : vector<1x32xi32> to vector<32x32xi32>
    %111 = arith.cmpi slt, %26, %110 : vector<32x32xi32>
    %c-2147483648_i32_35 = arith.constant -2147483648 : i32
    %112 = vector.broadcast %c-2147483648_i32_35 : i32 to vector<32x32xi32>
    %113 = arith.select %111, %26, %112 : vector<32x32xi1>, vector<32x32xi32>
    %cst_36 = arith.constant dense<-2147483648> : vector<32xi32>
    %114 = vector.multi_reduction <maxsi>, %113, %cst_36 [0] : vector<32x32xi32> to vector<32xi32>
    %115 = vector.shape_cast %114 : vector<32xi32> to vector<1x32xi32>
    %116 = vector.broadcast %109 : vector<1x32xi32> to vector<8x32xi32>
    %117 = arith.cmpi slt, %30, %116 : vector<8x32xi32>
    %c-2147483648_i32_37 = arith.constant -2147483648 : i32
    %118 = vector.broadcast %c-2147483648_i32_37 : i32 to vector<8x32xi32>
    %119 = arith.select %117, %30, %118 : vector<8x32xi1>, vector<8x32xi32>
    %cst_38 = arith.constant dense<-2147483648> : vector<32xi32>
    %120 = vector.multi_reduction <maxsi>, %119, %cst_38 [0] : vector<8x32xi32> to vector<32xi32>
    %121 = vector.shape_cast %120 : vector<32xi32> to vector<1x32xi32>
    %122 = arith.maxsi %115, %121 : vector<1x32xi32>
    %123 = vector.broadcast %122 : vector<1x32xi32> to vector<32x32xi32>
    %124 = arith.cmpi slt, %26, %123 : vector<32x32xi32>
    %c-2147483648_i32_39 = arith.constant -2147483648 : i32
    %125 = vector.broadcast %c-2147483648_i32_39 : i32 to vector<32x32xi32>
    %126 = arith.select %124, %26, %125 : vector<32x32xi1>, vector<32x32xi32>
    %cst_40 = arith.constant dense<-2147483648> : vector<32xi32>
    %127 = vector.multi_reduction <maxsi>, %126, %cst_40 [0] : vector<32x32xi32> to vector<32xi32>
    %128 = vector.shape_cast %127 : vector<32xi32> to vector<1x32xi32>
    %129 = vector.broadcast %122 : vector<1x32xi32> to vector<8x32xi32>
    %130 = arith.cmpi slt, %30, %129 : vector<8x32xi32>
    %c-2147483648_i32_41 = arith.constant -2147483648 : i32
    %131 = vector.broadcast %c-2147483648_i32_41 : i32 to vector<8x32xi32>
    %132 = arith.select %130, %30, %131 : vector<8x32xi1>, vector<8x32xi32>
    %cst_42 = arith.constant dense<-2147483648> : vector<32xi32>
    %133 = vector.multi_reduction <maxsi>, %132, %cst_42 [0] : vector<8x32xi32> to vector<32xi32>
    %134 = vector.shape_cast %133 : vector<32xi32> to vector<1x32xi32>
    %135 = arith.maxsi %128, %134 : vector<1x32xi32>
    %136 = tpu.concatenate %44, %57, %70, %83, %96, %109, %122, %135 in 0 : vector<1x32xi32>, vector<1x32xi32>, vector<1x32xi32>, vector<1x32xi32>, vector<1x32xi32>, vector<1x32xi32>, vector<1x32xi32>, vector<1x32xi32> -> vector<8x32xi32>
    %c0_43 = arith.constant 0 : index
    %c0_44 = arith.constant 0 : index
    %137 = vector.load %arg7[%c0_43, %c0_44] : memref<8x32xi32, #tpu.memory_space<vmem>>, vector<8x32xi32>
    tpu.vector_store %arg7[%c0_43, %c0_44], %136 {strides = array<i32>} : memref<8x32xi32, #tpu.memory_space<vmem>>, vector<8x32xi32>,
    %c0_i32_45 = arith.constant 0 : i32
    %138 = arith.cmpi eq, %arg2, %c0_i32_45 : i32
    %139 = arith.extui %138 : i1 to i32
    %c0_i32_46 = arith.constant 0 : i32
    %140 = arith.cmpi ne, %139, %c0_i32_46 : i32
    scf.if %140 {
      %c31_i32_47 = arith.constant 31 : i32
      %141 = vector.broadcast %c31_i32_47 : i32 to vector<8x32xi32>
      %142 = arith.andi %136, %141 : vector<8x32xi32>
      %c31_i32_48 = arith.constant 31 : i32
      %143 = vector.broadcast %c31_i32_48 : i32 to vector<8x32xi32>
      %144 = arith.subi %143, %142 : vector<8x32xi32>
      %c0_49 = arith.constant 0 : index
      %c0_50 = arith.constant 0 : index
      %c0_51 = arith.constant 0 : index
      %145 = vector.load %arg6[%c0_49, %c0_50, %c0_51] : memref<1x8x32xi32, #tpu.memory_space<vmem>>, vector<1x8x32xi32>
      %146 = vector.shape_cast %145 : vector<1x8x32xi32> to vector<8x32xi32>
      %147 = vector.shape_cast %144 : vector<8x32xi32> to vector<1x8x32xi32>
      tpu.vector_store %arg6[%c0_49, %c0_50, %c0_51], %147 {strides = array<i32>} : memref<1x8x32xi32, #tpu.memory_space<vmem>>, vector<1x8x32xi32>,
    } else {
    }
    return
  }
  func.func @transform_0(%arg0: i32, %arg1: i32, %arg2: i32) -> (i32, i32, i32) {
    %c0_i32 = arith.constant 0 : i32
    %c0_i32_0 = arith.constant 0 : i32
    return %arg0, %arg1, %c0_i32 : i32, i32, i32
  }
  func.func @transform_1(%arg0: i32, %arg1: i32, %arg2: i32) -> (i32, i32, i32) {
    %c0_i32 = arith.constant 0 : i32
    %c0_i32_0 = arith.constant 0 : i32
    %c0_i32_1 = arith.constant 0 : i32
    return %arg0, %c0_i32, %c0_i32_0 : i32, i32, i32
  }
  func.func @transform_2(%arg0: i32, %arg1: i32, %arg2: i32) -> (i32, i32, i32) {
    %c0_i32 = arith.constant 0 : i32
    %c0_i32_0 = arith.constant 0 : i32
    %c0_i32_1 = arith.constant 0 : i32
    return %arg0, %c0_i32, %c0_i32_0 : i32, i32, i32
  }
  func.func @transform_3(%arg0: i32, %arg1: i32, %arg2: i32) -> (i32, i32, i32) {
    %c0_i32 = arith.constant 0 : i32
    %c0_i32_0 = arith.constant 0 : i32
    return %arg0, %c0_i32, %arg1 : i32, i32, i32
  }
}

</mosaic_0001>

<llo_original>
// kernel: dilated_knn_graph.1
$region0: #{dilated_knn_graph.1}
  #allocation0 [shape = 'u32[]', space=smem, size = 0x4, offset = 0x4, fixed_abs, tag = 'smem constant byte address 0x4 - core index']
  #allocation1 [shape = 'u32[144,128]{1,0:T(1,128)}', space=vmem, size = 0x12000, scoped, tag = 'internal scratch']
  #allocation2 [shape = 's32[8,32]{1,0:T(8,128)}', space=vmem, size = 0x1000, scoped, tag = 'scratch operand']
  %s0 = inlined_call_operand.vmem [shape: bf16[2,32,16], index: 0, kind: input, shape index: {}, may-alias: {0,1}]
  %s1 = inlined_call_operand.vmem [shape: bf16[2,32,16], index: 1, kind: input, shape index: {}, may-alias: {0,1}]
  %s2 = inlined_call_operand.vmem [shape: f32[2,32,1], index: 2, kind: input, shape index: {}]
  %s3 = inlined_call_operand.vmem [shape: s32[2,8,32], index: 3, kind: output, shape index: {}]
  %s4 = sld [smem:[#allocation0]]
  $region53: #{dilated_knn_graph.1} parent=0
    _
  %s6 = ssub.s32 1, %s4
  %s7 = scalar_select 0, %s6, %s4
  loop: start=0, step=1, limit=4
  $region2: #{dilated_knn_graph.1} parent=0 // loop_pre_header
    _
  $region3: #{dilated_knn_graph.1} parent=0 // loop_header
    %s9 = sphi 0, %s13
    %p10 = scmp.ge.s32.totalorder %s9, 4
    %s16 = sphi 0, %s35
    %s17 = sphi 0, %s31
    %s18 = sphi 0, %s27
    %s19 = sphi 0, %s16
    %s20 = sphi 0, %s17
    %s21 = sphi 0, %s18
    %s22 = sphi 0, %s19
    %s23 = sphi 0, %s20
    %s24 = sphi 0, %s21
    %s40 = sphi 0, %s42
    %s43 = sphi 0, %s40
    %s44 = sphi 0, %s43
    %s60 = sphi 0, %s44
    %s66 = sphi 0, %s68
    %s69 = sphi 0, %s66
    %s70 = sphi 0, %s69
    %s86 = sphi 0, %s70
    %s92 = sphi 0, %s94
    %s95 = sphi 0, %s92
    %s96 = sphi 0, %s95
    %s112 = sphi 0, %s96
    %s120 = sphi 0, %s122
    %s123 = sphi 0, %s120
    %s124 = sphi 0, %s123
    %s140 = sphi 0, %s124
  $region4: #{dilated_knn_graph.1} parent=0 // loop_header_branch
    %12 = sbr.rel (%p10) target = $region8
  $region5: #{dilated_knn_graph.1} parent=0 // loop_body
    %s14 = ssub.s32 %s9, 1
    %s15 = ssub.s32 %s9, 2
    %s25 = sadd.s32 1, %s18
    %p26 = scmp.ge.s32.totalorder %s25, 1
    %s27 = scalar_select %p26, 0, %s25
    %s28 = sadd.s32 1, %s17
    %s29 = scalar_select %p26, %s28, %s17
    %p30 = scmp.ge.s32.totalorder %s29, 1
    %s31 = scalar_select %p30, 0, %s29
    %s32 = sadd.s32 1, %s16
    %s33 = scalar_select %p30, %s32, %s16
    %p34 = scmp.ge.s32.totalorder %s33, 2
    %s35 = scalar_select %p34, 0, %s33
    %s36 = ssub.s32 %s16, %s35
    %s37 = ssub.s32 %s17, %s31
    %s38 = sor.u32 %s36, %s37
    %p39 = scmp.eq.s32.totalorder %s38, 0
    %s41 = sadd.s32 %s40, 1
    %s42 = scalar_select %p39, %s40, %s41
    %p45 = pneg %p39
    %p46 = scmp.eq.s32.totalorder %s9, 1
    %p47 = por %p45, %p46
    %p48 = scmp.ne.s32.totalorder %s40, %s43
    %p49 = scmp.eq.s32.totalorder %s9, 0
    %p50 = por %p48, %p49
    %p51 = scmp.ne.s32.totalorder %s40, %s43
    %p52 = scmp.eq.s32.totalorder %s14, 1
    %p53 = por %p51, %p52
    %p54 = scmp.ne.s32.totalorder %s43, %s44
    %p55 = scmp.eq.s32.totalorder %s14, 0
    %p56 = por %p54, %p55
    %p57 = scmp.ne.s32.totalorder %s43, %s44
    %p58 = scmp.eq.s32.totalorder %s15, 1
    %p59 = por %p57, %p58
    %p61 = scmp.ne.s32.totalorder %s44, %s60
    %p62 = scmp.eq.s32.totalorder %s15, 0
    %p63 = por %p61, %p62
    %s64 = ssub.s32 %s16, %s35
    %p65 = scmp.eq.s32.totalorder %s64, 0
    %s67 = sadd.s32 %s66, 1
    %s68 = scalar_select %p65, %s66, %s67
    %p71 = pneg %p65
    %p72 = scmp.eq.s32.totalorder %s9, 1
    %p73 = por %p71, %p72
    %p74 = scmp.ne.s32.totalorder %s66, %s69
    %p75 = scmp.eq.s32.totalorder %s9, 0
    %p76 = por %p74, %p75
    %p77 = scmp.ne.s32.totalorder %s66, %s69
    %p78 = scmp.eq.s32.totalorder %s14, 1
    %p79 = por %p77, %p78
    %p80 = scmp.ne.s32.totalorder %s69, %s70
    %p81 = scmp.eq.s32.totalorder %s14, 0
    %p82 = por %p80, %p81
    %p83 = scmp.ne.s32.totalorder %s69, %s70
    %p84 = scmp.eq.s32.totalorder %s15, 1
    %p85 = por %p83, %p84
    %p87 = scmp.ne.s32.totalorder %s70, %s86
    %p88 = scmp.eq.s32.totalorder %s15, 0
    %p89 = por %p87, %p88
    %s90 = ssub.s32 %s16, %s35
    %p91 = scmp.eq.s32.totalorder %s90, 0
    %s93 = sadd.s32 %s92, 1
    %s94 = scalar_select %p91, %s92, %s93
    %p97 = pneg %p91
    %p98 = scmp.eq.s32.totalorder %s9, 1
    %p99 = por %p97, %p98
    %p100 = scmp.ne.s32.totalorder %s92, %s95
    %p101 = scmp.eq.s32.totalorder %s9, 0
    %p102 = por %p100, %p101
    %p103 = scmp.ne.s32.totalorder %s92, %s95
    %p104 = scmp.eq.s32.totalorder %s14, 1
    %p105 = por %p103, %p104
    %p106 = scmp.ne.s32.totalorder %s95, %s96
    %p107 = scmp.eq.s32.totalorder %s14, 0
    %p108 = por %p106, %p107
    %p109 = scmp.ne.s32.totalorder %s95, %s96
    %p110 = scmp.eq.s32.totalorder %s15, 1
    %p111 = por %p109, %p110
    %p113 = scmp.ne.s32.totalorder %s96, %s112
    %p114 = scmp.eq.s32.totalorder %s15, 0
    %p115 = por %p113, %p114
    %s116 = ssub.s32 %s16, %s35
    %s117 = ssub.s32 %s17, %s31
    %s118 = sor.u32 %s116, %s117
    %p119 = scmp.eq.s32.totalorder %s118, 0
    %s121 = sadd.s32 %s120, 1
    %s122 = scalar_select %p119, %s120, %s121
    %p125 = pneg %p119
    %p126 = scmp.eq.s32.totalorder %s9, 1
    %p127 = por %p125, %p126
    %p128 = scmp.ne.s32.totalorder %s120, %s123
    %p129 = scmp.eq.s32.totalorder %s9, 0
    %p130 = por %p128, %p129
    %p131 = scmp.ne.s32.totalorder %s120, %s123
    %p132 = scmp.eq.s32.totalorder %s14, 1
    %p133 = por %p131, %p132
    %p134 = scmp.ne.s32.totalorder %s123, %s124
    %p135 = scmp.eq.s32.totalorder %s14, 0
    %p136 = por %p134, %p135
    %p137 = scmp.ne.s32.totalorder %s123, %s124
    %p138 = scmp.eq.s32.totalorder %s15, 1
    %p139 = por %p137, %p138
    %p141 = scmp.ne.s32.totalorder %s124, %s140
    %p142 = scmp.eq.s32.totalorder %s15, 0
    %p143 = por %p141, %p142
    %p144 = scmp.le.s32.totalorder 1, %s9
    %p145 = scmp.lt.s32.totalorder %s9, 3
    %p146 = pnand %p144, %p145
    %p147 = pneg %p146
    // Predicated region
    $region9: #{dilated_knn_graph.1} parent=5 // pred_check
      _
    $region10: #{dilated_knn_graph.1} parent=5 // pred_check_branch
      %149 = sbr.rel (%p146) target = $region12
    $region11: #{dilated_knn_graph.1} parent=5 // pred_region
      %s150 = ssub.s32 %s9, 1
    $region12: #{dilated_knn_graph.1} parent=5 // pred_fallthru
      _
    %p151 = scmp.lt.s32.totalorder %s9, 2
    // Predicated region
    $region13: #{dilated_knn_graph.1} parent=5 // pred_check
      %p152 = pneg %p151
    $region14: #{dilated_knn_graph.1} parent=5 // pred_check_branch
      %154 = sbr.rel (%p152) target = $region16
    $region15: #{dilated_knn_graph.1} parent=5 // pred_region
      // Predicated region
      $region17: #{dilated_knn_graph.1} parent=15 // pred_check
        %p155 = pneg %p50
      $region18: #{dilated_knn_graph.1} parent=15 // pred_check_branch
        %157 = sbr.rel (%p155) target = $region20
      $region19: #{dilated_knn_graph.1} parent=15 // pred_region
        %s158 = smul.u32 4, %s17
        %p159 = scmp.lt.s32.totalorder %s16, 1
        %s160 = scalar_select %p159, %s16, 1
        %p161 = scmp.lt.s32.totalorder %s158, 3
        %s162 = scalar_select %p161, %s158, 3
        %s163 = smul.addr %s160, 4
        %s164 = sadd.s32 %s162, %s163
        %s165 = smul.addr %s164, 4
        %s166 = scalar_lea.vmem %s0, %s165
        %s167 = smul.u32 4, %s17
      $region20: #{dilated_knn_graph.1} parent=15 // pred_fallthru
        _
      // Predicated region
      $region21: #{dilated_knn_graph.1} parent=15 // pred_check
        %p168 = pneg %p76
      $region22: #{dilated_knn_graph.1} parent=15 // pred_check_branch
        %170 = sbr.rel (%p168) target = $region24
      $region23: #{dilated_knn_graph.1} parent=15 // pred_region
        %p171 = scmp.lt.s32.totalorder %s16, 1
        %s172 = scalar_select %p171, %s16, 1
        %s173 = smul.addr %s172, 4
        %s174 = smul.addr %s173, 4
        %s175 = scalar_lea.vmem %s1, %s174
      $region24: #{dilated_knn_graph.1} parent=15 // pred_fallthru
        _
      // Predicated region
      $region25: #{dilated_knn_graph.1} parent=15 // pred_check
        %p176 = pneg %p102
      $region26: #{dilated_knn_graph.1} parent=15 // pred_check_branch
        %178 = sbr.rel (%p176) target = $region28
      $region27: #{dilated_knn_graph.1} parent=15 // pred_region
        %p179 = scmp.lt.s32.totalorder %s16, 1
        %s180 = scalar_select %p179, %s16, 1
        %s181 = smul.addr %s180, 4
        %s182 = smul.addr %s181, 8
        %s183 = scalar_lea.vmem %s2, %s182
      $region28: #{dilated_knn_graph.1} parent=15 // pred_fallthru
        _
    $region16: #{dilated_knn_graph.1} parent=5 // pred_fallthru
      _
    %p184 = scmp.le.s32.totalorder 1, %s9
    %p185 = scmp.lt.s32.totalorder %s9, 3
    %p186 = pnand %p184, %p185
    %p187 = pneg %p186
    // Predicated region
    $region29: #{dilated_knn_graph.1} parent=5 // pred_check
      _
    $region30: #{dilated_knn_graph.1} parent=5 // pred_check_branch
      %189 = sbr.rel (%p186) target = $region32
    $region31: #{dilated_knn_graph.1} parent=5 // pred_region
      %s190 = ssub.s32 %s9, 1
      %s191 = smul.u32 4, %s20
      %p192 = scmp.lt.s32.totalorder %s19, 1
      %s193 = scalar_select %p192, %s19, 1
      %p194 = scmp.lt.s32.totalorder %s191, 3
      %s195 = scalar_select %p194, %s191, 3
      %s196 = smul.addr %s193, 4
      %s197 = sadd.s32 %s195, %s196
      %s198 = smul.addr %s197, 4
      %s199 = scalar_lea.vmem %s0, %s198
      %p200 = pneg %p56
      %p201 = pneg %p53
      %p202 = scmp.lt.s32.totalorder %s19, 1
      %s203 = scalar_select %p202, %s19, 1
      %s204 = smul.addr %s203, 4
      %s205 = smul.addr %s204, 4
      %s206 = scalar_lea.vmem %s1, %s205
      %p207 = pneg %p82
      %p208 = pneg %p79
      %p209 = scmp.lt.s32.totalorder %s19, 1
      %s210 = scalar_select %p209, %s19, 1
      %s211 = smul.addr %s210, 4
      %s212 = smul.addr %s211, 8
      %s213 = scalar_lea.vmem %s2, %s212
      %p214 = pneg %p108
      %p215 = pneg %p105
      %p216 = pneg %p136
      %p217 = pneg %p133
      %p218 = scmp.lt.s32.totalorder %s19, 1
      %s219 = scalar_select %p218, %s19, 1
      %p220 = scmp.lt.s32.totalorder %s20, 0
      %s221 = scalar_select %p220, %s20, 0
      %s222 = sadd.s32 %s221, %s219
      %s223 = smul.addr %s222, 8
      %s224 = scalar_lea.vmem %s3, %s223
      %s225 = smul.u32 4, %s20
      %p226 = scmp.lt.s32.totalorder %s19, 1
      %s227 = scalar_select %p226, %s19, 1
      %p228 = scmp.lt.s32.totalorder %s225, 3
      %s229 = scalar_select %p228, %s225, 3
      %s230 = smul.addr %s227, 4
      %s231 = sadd.s32 %s229, %s230
      %s232 = smul.addr %s231, 4
      %s233 = scalar_lea.vmem %s0, %s232
      %s234 = smul.u32 4, %s20
      %p235 = scmp.lt.s32.totalorder %s19, 1
      %s236 = scalar_select %p235, %s19, 1
      %s237 = smul.addr %s236, 4
      %s238 = smul.addr %s237, 4
      %s239 = scalar_lea.vmem %s1, %s238
      %p240 = scmp.lt.s32.totalorder %s19, 1
      %s241 = scalar_select %p240, %s19, 1
      %s242 = smul.addr %s241, 4
      %s243 = smul.addr %s242, 8
      %s244 = scalar_lea.vmem %s2, %s243
      %p245 = scmp.lt.s32.totalorder %s19, 1
      %s246 = scalar_select %p245, %s19, 1
      %p247 = scmp.lt.s32.totalorder %s20, 0
      %s248 = scalar_select %p247, %s20, 0
      %s249 = sadd.s32 %s248, %s246
      %s250 = smul.addr %s249, 8
      %s251 = scalar_lea.vmem %s3, %s250
      %s253 = smul.u32 %s21, 32
      %v254 = vld [vmem:[%s233] sm:$0xf]
      %v255 = vld [vmem:[%s233 + $0x4] sm:$0xf]
      %v256 = vld [vmem:[%s233 + $0x8] sm:$0xf]
      %v257 = vld [vmem:[%s233 + $0xc] sm:$0xf]
      %s258 = sshra.s32 %s253, 3
      %s259 = sand.u32 %s253, 7
      %s260 = smul.addr %s258, 4
      %s261 = scalar_lea.vmem %s239, %s260
      %v262 = vld [vmem:[%s261] sm:$0xf]
      %v263 = vld [vmem:[%s261 + $0x4] sm:$0xf]
      %v264 = vld [vmem:[%s261 + $0x8] sm:$0xf]
      %v265 = vld [vmem:[%s261 + $0xc] sm:$0xf]
      %s266 = scalar_lea.vmem %s244, %s253
      %v267 = vld [vmem:[%s266] sm:$0xff]
      %v268 = vld [vmem:[%s266 + $0x8] sm:$0xff]
      %v269 = vld [vmem:[%s266 + $0x10] sm:$0xff]
      %v270 = vld [vmem:[%s266 + $0x18] sm:$0xff]
      %272 = vset.pattern.permute.xlu0 0
      %273 = vperm.xlu0 %272, %v267
      %v274 = vpop.permute.xlu0 %273
      %277 = vset.pattern.permute.xlu0 0
      %278 = vperm.xlu0 %277, %v268
      %v279 = vpop.permute.xlu0 %278
      %282 = vset.pattern.permute.xlu0 0
      %283 = vperm.xlu0 %282, %v269
      %v284 = vpop.permute.xlu0 %283
      %287 = vset.pattern.permute.xlu0 0
      %288 = vperm.xlu0 %287, %v270
      %v289 = vpop.permute.xlu0 %288
      %v295 = vunpack.c.l.b16 %v262
      %v296 = vunpack.c.l.b16 %v263
      %v297 = vunpack.c.l.b16 %v264
      %v298 = vunpack.c.l.b16 %v265
      %v299 = vpack.c.b16 %v296, %v295
      %v300 = vpack.c.b16 %v298, %v297
      %v305 = vunpack.c.l.b16 %v254
      %v306 = vunpack.c.l.b16 %v255
      %v307 = vunpack.c.l.b16 %v256
      %v308 = vunpack.c.l.b16 %v257
      %v309 = vpack.c.b16 %v306, %v305
      %v310 = vpack.c.b16 %v308, %v307
      %vm311 = vcmask 130048
      %v313 = vsel %vm311, %v299, 0
      %v316 = vsel %vm311, %v300, 0
      %v319 = vsel %vm311, %v309, 0
      %v322 = vsel %vm311, %v310, 0
      %324 = vmatprep.subr.bf16.mxu0 0
      %325 = vmatpush1.bf16.xpose.msra.mxu0 %v319
      %326 = vmatprep.subr.bf16.mxu0 0
      %327 = vmatpush1.bf16.xpose.msra.mxu0 %v322
      %328 = vmatprep.subr.bf16.mxu0 0
      %329 = vmatpush1.bf16.xpose.msra.mxu0 0
      %330 = vmatprep.subr.bf16.mxu0 0
      %331 = vmatpush1.bf16.xpose.msra.mxu0 0
      %332 = vmatprep.subr.bf16.mxu0 0
      %333 = vmatpush1.bf16.xpose.msra.mxu0 0
      %334 = vmatprep.subr.bf16.mxu0 0
      %335 = vmatpush1.bf16.xpose.msra.mxu0 0
      %336 = vmatprep.subr.bf16.mxu0 0
      %337 = vmatpush1.bf16.xpose.msra.mxu0 0
      %338 = vmatprep.subr.bf16.mxu0 0
      %339 = vmatpush1.bf16.xpose.msra.mxu0 0
      %340 = vmatprep.subr.bf16.mxu0 0
      %341 = vmatpush1.bf16.xpose.msra.mxu0 0
      %342 = vmatprep.subr.bf16.mxu0 0
      %343 = vmatpush1.bf16.xpose.msra.mxu0 0
      %344 = vmatprep.subr.bf16.mxu0 0
      %345 = vmatpush1.bf16.xpose.msra.mxu0 0
      %346 = vmatprep.subr.bf16.mxu0 0
      %347 = vmatpush1.bf16.xpose.msra.mxu0 0
      %348 = vmatprep.subr.bf16.mxu0 0
      %349 = vmatpush1.bf16.xpose.msra.mxu0 0
      %350 = vmatprep.subr.bf16.mxu0 0
      %351 = vmatpush1.bf16.xpose.msra.mxu0 0
      %352 = vmatprep.subr.bf16.mxu0 0
      %353 = vmatpush1.bf16.xpose.msra.mxu0 0
      %354 = vmatprep.subr.bf16.mxu0 0
      %355 = vmatpush1.bf16.xpose.msra.mxu0 0
      %356 = vmatprep.mubr.bf16.mxu0 0
      %357 = vmatmul.mubr.bf16.gmra.mrb[0].mxu0 %v313
      %v358 = vpop.f32.mrb[0].mxu0
      %v359 = vadd.f32 %v274, %v358
      %v360 = vpop.f32.mrb[0].mxu0
      %v361 = vpop.f32.mrb[0].mxu0
      %v362 = vadd.f32 %v279, %v361
      %v363 = vpop.f32.mrb[0].mxu0
      %364 = vmatprep.mubr.bf16.mxu0 0
      %365 = vmatmul.mubr.bf16.gmra.mrb[0].mxu0 %v316
      %v366 = vpop.f32.mrb[0].mxu0
      %v367 = vadd.f32 %v284, %v366
      %v368 = vpop.f32.mrb[0].mxu0
      %v369 = vpop.f32.mrb[0].mxu0
      %v370 = vadd.f32 %v289, %v369
      %v371 = vpop.f32.mrb[0].mxu0
      %372 = vdwg.mxu0
      %vm377 = vcmp.lt.s32.totalorder %v359, 0
      %vm378 = vcmp.lt.s32.totalorder %v362, 0
      %vm379 = vcmp.lt.s32.totalorder %v367, 0
      %vm380 = vcmp.lt.s32.totalorder %v370, 0
      %v381 = vxor.u32 %v359, 2147483647
      %v382 = vxor.u32 %v362, 2147483647
      %v383 = vxor.u32 %v367, 2147483647
      %v384 = vxor.u32 %v370, 2147483647
      %v385 = vsel %vm377, %v381, %v359
      %v386 = vsel %vm378, %v382, %v362
      %v387 = vsel %vm379, %v383, %v367
      %v388 = vsel %vm380, %v384, %v370
      %s389 = ssub.s32 31, %s253
      %v390 = vlaneseq
      %v391 = vshrl.u32 %v390, 7
      %v392 = vadd.s32 %v391, 8
      %v393 = vadd.s32 %v391, 16
      %v394 = vadd.s32 %v391, 24
      %v395 = vstv %s389
      %v396 = vsub.s32 %v395, %v391
      %v397 = vsub.s32 %v395, %v392
      %v398 = vsub.s32 %v395, %v393
      %v399 = vsub.s32 %v395, %v394
      %v400 = vand.u32 %v385, 4294967264
      %v401 = vand.u32 %v386, 4294967264
      %v402 = vand.u32 %v387, 4294967264
      %v403 = vand.u32 %v388, 4294967264
      %v404 = vor.u32 %v400, %v396
      %v405 = vor.u32 %v401, %v397
      %v406 = vor.u32 %v402, %v398
      %v407 = vor.u32 %v403, %v399
      %p408 = scmp.eq.s32.totalorder %s21, 0
      // Predicated region
      $region33: #{dilated_knn_graph.1} parent=31 // pred_check
        %p409 = pneg %p408
      $region34: #{dilated_knn_graph.1} parent=31 // pred_check_branch
        %411 = sbr.rel (%p409) target = $region36
      $region35: #{dilated_knn_graph.1} parent=31 // pred_region
        %vm412 = vcmask 261120
        %413 = vst.msk [vmem:[#allocation2] sm:$0xff] %vm412, 2147483648
      $region36: #{dilated_knn_graph.1} parent=31 // pred_fallthru
        _
      %v414 = vld [vmem:[#allocation2] sm:$0xff]
      %vm415 = vcmp.lt.s32.totalorder %v404, 2147483647
      %vm416 = vcmp.lt.s32.totalorder %v405, 2147483647
      %vm417 = vcmp.lt.s32.totalorder %v406, 2147483647
      %vm418 = vcmp.lt.s32.totalorder %v407, 2147483647
      %v419 = vsel %vm415, %v404, 2147483648
      %v420 = vsel %vm416, %v405, 2147483648
      %v421 = vsel %vm417, %v406, 2147483648
      %v422 = vsel %vm418, %v407, 2147483648
      %vm423 = vcmask 261120
      %v424 = vsel %vm423, %v419, 2147483648
      %v425 = vsel %vm423, %v420, 2147483648
      %v426 = vsel %vm423, %v421, 2147483648
      %v427 = vsel %vm423, %v422, 2147483648
      %vm428 = vcmp.gt.s32.totalorder %v424, %v425
      %v429 = vsel %vm428, %v424, %v425
      %vm430 = vcmp.gt.s32.totalorder %v426, %v427
      %v431 = vsel %vm430, %v426, %v427
      %vm432 = vcmp.gt.s32.totalorder %v429, %v431
      %v433 = vsel %vm432, %v429, %v431
      %v434 = vrot.slane %v433, 4
      %vm435 = vcmp.gt.s32.totalorder %v433, %v434
      %v436 = vsel %vm435, %v433, %v434
      %v437 = vrot.slane %v436, 2
      %vm438 = vcmp.gt.s32.totalorder %v436, %v437
      %v439 = vsel %vm438, %v436, %v437
      %v440 = vrot.slane %v439, 1
      %vm441 = vcmp.gt.s32.totalorder %v439, %v440
      %v442 = vsel %vm441, %v439, %v440
      %vm443 = vcmp.lt.s32.totalorder %v414, 2147483647
      %v444 = vsel %vm443, %v414, 2147483648
      %v445 = vsel %vm423, %v444, 2147483648
      %v446 = vrot.slane %v445, 4
      %vm447 = vcmp.gt.s32.totalorder %v445, %v446
      %v448 = vsel %vm447, %v445, %v446
      %v449 = vrot.slane %v448, 2
      %vm450 = vcmp.gt.s32.totalorder %v448, %v449
      %v451 = vsel %vm450, %v448, %v449
      %v452 = vrot.slane %v451, 1
      %vm453 = vcmp.gt.s32.totalorder %v451, %v452
      %v454 = vsel %vm453, %v451, %v452
      %vm455 = vcmp.gt.s32.totalorder %v442, %v454
      %v456 = vsel %vm455, %v442, %v454
      %vm457 = vcmp.lt.s32.totalorder %v404, %v456
      %vm458 = vcmp.lt.s32.totalorder %v405, %v456
      %vm459 = vcmp.lt.s32.totalorder %v406, %v456
      %vm460 = vcmp.lt.s32.totalorder %v407, %v456
      %v461 = vsel %vm457, %v404, 2147483648
      %v462 = vsel %vm458, %v405, 2147483648
      %v463 = vsel %vm459, %v406, 2147483648
      %v464 = vsel %vm460, %v407, 2147483648
      %v465 = vsel %vm423, %v461, 2147483648
      %v466 = vsel %vm423, %v462, 2147483648
      %v467 = vsel %vm423, %v463, 2147483648
      %v468 = vsel %vm423, %v464, 2147483648
      %vm469 = vcmp.gt.s32.totalorder %v465, %v466
      %v470 = vsel %vm469, %v465, %v466
      %vm471 = vcmp.gt.s32.totalorder %v467, %v468
      %v472 = vsel %vm471, %v467, %v468
      %vm473 = vcmp.gt.s32.totalorder %v470, %v472
      %v474 = vsel %vm473, %v470, %v472
      %v475 = vrot.slane %v474, 4
      %vm476 = vcmp.gt.s32.totalorder %v474, %v475
      %v477 = vsel %vm476, %v474, %v475
      %v478 = vrot.slane %v477, 2
      %vm479 = vcmp.gt.s32.totalorder %v477, %v478
      %v480 = vsel %vm479, %v477, %v478
      %v481 = vrot.slane %v480, 1
      %vm482 = vcmp.gt.s32.totalorder %v480, %v481
      %v483 = vsel %vm482, %v480, %v481
      %vm484 = vcmp.lt.s32.totalorder %v414, %v456
      %v485 = vsel %vm484, %v414, 2147483648
      %v486 = vsel %vm423, %v485, 2147483648
      %v487 = vrot.slane %v486, 4
      %vm488 = vcmp.gt.s32.totalorder %v486, %v487
      %v489 = vsel %vm488, %v486, %v487
      %v490 = vrot.slane %v489, 2
      %vm491 = vcmp.gt.s32.totalorder %v489, %v490
      %v492 = vsel %vm491, %v489, %v490
      %v493 = vrot.slane %v492, 1
      %vm494 = vcmp.gt.s32.totalorder %v492, %v493
      %v495 = vsel %vm494, %v492, %v493
      %vm496 = vcmp.gt.s32.totalorder %v483, %v495
      %v497 = vsel %vm496, %v483, %v495
      %vm498 = vcmp.lt.s32.totalorder %v404, %v497
      %vm499 = vcmp.lt.s32.totalorder %v405, %v497
      %vm500 = vcmp.lt.s32.totalorder %v406, %v497
      %vm501 = vcmp.lt.s32.totalorder %v407, %v497
      %v502 = vsel %vm498, %v404, 2147483648
      %v503 = vsel %vm499, %v405, 2147483648
      %v504 = vsel %vm500, %v406, 2147483648
      %v505 = vsel %vm501, %v407, 2147483648
      %v506 = vsel %vm423, %v502, 2147483648
      %v507 = vsel %vm423, %v503, 2147483648
      %v508 = vsel %vm423, %v504, 2147483648
      %v509 = vsel %vm423, %v505, 2147483648
      %vm510 = vcmp.gt.s32.totalorder %v506, %v507
      %v511 = vsel %vm510, %v506, %v507
      %vm512 = vcmp.gt.s32.totalorder %v508, %v509
      %v513 = vsel %vm512, %v508, %v509
      %vm514 = vcmp.gt.s32.totalorder %v511, %v513
      %v515 = vsel %vm514, %v511, %v513
      %v516 = vrot.slane %v515, 4
      %vm517 = vcmp.gt.s32.totalorder %v515, %v516
      %v518 = vsel %vm517, %v515, %v516
      %v519 = vrot.slane %v518, 2
      %vm520 = vcmp.gt.s32.totalorder %v518, %v519
      %v521 = vsel %vm520, %v518, %v519
      %v522 = vrot.slane %v521, 1
      %vm523 = vcmp.gt.s32.totalorder %v521, %v522
      %v524 = vsel %vm523, %v521, %v522
      %vm525 = vcmp.lt.s32.totalorder %v414, %v497
      %v526 = vsel %vm525, %v414, 2147483648
      %v527 = vsel %vm423, %v526, 2147483648
      %v528 = vrot.slane %v527, 4
      %vm529 = vcmp.gt.s32.totalorder %v527, %v528
      %v530 = vsel %vm529, %v527, %v528
      %v531 = vrot.slane %v530, 2
      %vm532 = vcmp.gt.s32.totalorder %v530, %v531
      %v533 = vsel %vm532, %v530, %v531
      %v534 = vrot.slane %v533, 1
      %vm535 = vcmp.gt.s32.totalorder %v533, %v534
      %v536 = vsel %vm535, %v533, %v534
      %vm537 = vcmp.gt.s32.totalorder %v524, %v536
      %v538 = vsel %vm537, %v524, %v536
      %vm539 = vcmp.lt.s32.totalorder %v404, %v538
      %vm540 = vcmp.lt.s32.totalorder %v405, %v538
      %vm541 = vcmp.lt.s32.totalorder %v406, %v538
      %vm542 = vcmp.lt.s32.totalorder %v407, %v538
      %v543 = vsel %vm539, %v404, 2147483648
      %v544 = vsel %vm540, %v405, 2147483648
      %v545 = vsel %vm541, %v406, 2147483648
      %v546 = vsel %vm542, %v407, 2147483648
      %v547 = vsel %vm423, %v543, 2147483648
      %v548 = vsel %vm423, %v544, 2147483648
      %v549 = vsel %vm423, %v545, 2147483648
      %v550 = vsel %vm423, %v546, 2147483648
      %vm551 = vcmp.gt.s32.totalorder %v547, %v548
      %v552 = vsel %vm551, %v547, %v548
      %vm553 = vcmp.gt.s32.totalorder %v549, %v550
      %v554 = vsel %vm553, %v549, %v550
      %vm555 = vcmp.gt.s32.totalorder %v552, %v554
      %v556 = vsel %vm555, %v552, %v554
      %v557 = vrot.slane %v556, 4
      %vm558 = vcmp.gt.s32.totalorder %v556, %v557
      %v559 = vsel %vm558, %v556, %v557
      %v560 = vrot.slane %v559, 2
      %vm561 = vcmp.gt.s32.totalorder %v559, %v560
      %v562 = vsel %vm561, %v559, %v560
      %v563 = vrot.slane %v562, 1
      %vm564 = vcmp.gt.s32.totalorder %v562, %v563
      %v565 = vsel %vm564, %v562, %v563
      %vm566 = vcmp.lt.s32.totalorder %v414, %v538
      %v567 = vsel %vm566, %v414, 2147483648
      %v568 = vsel %vm423, %v567, 2147483648
      %v569 = vrot.slane %v568, 4
      %vm570 = vcmp.gt.s32.totalorder %v568, %v569
      %v571 = vsel %vm570, %v568, %v569
      %v572 = vrot.slane %v571, 2
      %vm573 = vcmp.gt.s32.totalorder %v571, %v572
      %v574 = vsel %vm573, %v571, %v572
      %v575 = vrot.slane %v574, 1
      %vm576 = vcmp.gt.s32.totalorder %v574, %v575
      %v577 = vsel %vm576, %v574, %v575
      %vm578 = vcmp.gt.s32.totalorder %v565, %v577
      %v579 = vsel %vm578, %v565, %v577
      %vm580 = vcmp.lt.s32.totalorder %v404, %v579
      %vm581 = vcmp.lt.s32.totalorder %v405, %v579
      %vm582 = vcmp.lt.s32.totalorder %v406, %v579
      %vm583 = vcmp.lt.s32.totalorder %v407, %v579
      %v584 = vsel %vm580, %v404, 2147483648
      %v585 = vsel %vm581, %v405, 2147483648
      %v586 = vsel %vm582, %v406, 2147483648
      %v587 = vsel %vm583, %v407, 2147483648
      %v588 = vsel %vm423, %v584, 2147483648
      %v589 = vsel %vm423, %v585, 2147483648
      %v590 = vsel %vm423, %v586, 2147483648
      %v591 = vsel %vm423, %v587, 2147483648
      %vm592 = vcmp.gt.s32.totalorder %v588, %v589
      %v593 = vsel %vm592, %v588, %v589
      %vm594 = vcmp.gt.s32.totalorder %v590, %v591
      %v595 = vsel %vm594, %v590, %v591
      %vm596 = vcmp.gt.s32.totalorder %v593, %v595
      %v597 = vsel %vm596, %v593, %v595
      %v598 = vrot.slane %v597, 4
      %vm599 = vcmp.gt.s32.totalorder %v597, %v598
      %v600 = vsel %vm599, %v597, %v598
      %v601 = vrot.slane %v600, 2
      %vm602 = vcmp.gt.s32.totalorder %v600, %v601
      %v603 = vsel %vm602, %v600, %v601
      %v604 = vrot.slane %v603, 1
      %vm605 = vcmp.gt.s32.totalorder %v603, %v604
      %v606 = vsel %vm605, %v603, %v604
      %vm607 = vcmp.lt.s32.totalorder %v414, %v579
      %v608 = vsel %vm607, %v414, 2147483648
      %v609 = vsel %vm423, %v608, 2147483648
      %v610 = vrot.slane %v609, 4
      %vm611 = vcmp.gt.s32.totalorder %v609, %v610
      %v612 = vsel %vm611, %v609, %v610
      %v613 = vrot.slane %v612, 2
      %vm614 = vcmp.gt.s32.totalorder %v612, %v613
      %v615 = vsel %vm614, %v612, %v613
      %v616 = vrot.slane %v615, 1
      %vm617 = vcmp.gt.s32.totalorder %v615, %v616
      %v618 = vsel %vm617, %v615, %v616
      %vm619 = vcmp.gt.s32.totalorder %v606, %v618
      %v620 = vsel %vm619, %v606, %v618
      %vm621 = vcmp.lt.s32.totalorder %v404, %v620
      %vm622 = vcmp.lt.s32.totalorder %v405, %v620
      %vm623 = vcmp.lt.s32.totalorder %v406, %v620
      %vm624 = vcmp.lt.s32.totalorder %v407, %v620
      %v625 = vsel %vm621, %v404, 2147483648
      %v626 = vsel %vm622, %v405, 2147483648
      %v627 = vsel %vm623, %v406, 2147483648
      %v628 = vsel %vm624, %v407, 2147483648
      %v629 = vsel %vm423, %v625, 2147483648
      %v630 = vsel %vm423, %v626, 2147483648
      %v631 = vsel %vm423, %v627, 2147483648
      %v632 = vsel %vm423, %v628, 2147483648
      %vm633 = vcmp.gt.s32.totalorder %v629, %v630
      %v634 = vsel %vm633, %v629, %v630
      %vm635 = vcmp.gt.s32.totalorder %v631, %v632
      %v636 = vsel %vm635, %v631, %v632
      %vm637 = vcmp.gt.s32.totalorder %v634, %v636
      %v638 = vsel %vm637, %v634, %v636
      %v639 = vrot.slane %v638, 4
      %vm640 = vcmp.gt.s32.totalorder %v638, %v639
      %v641 = vsel %vm640, %v638, %v639
      %v642 = vrot.slane %v641, 2
      %vm643 = vcmp.gt.s32.totalorder %v641, %v642
      %v644 = vsel %vm643, %v641, %v642
      %v645 = vrot.slane %v644, 1
      %vm646 = vcmp.gt.s32.totalorder %v644, %v645
      %v647 = vsel %vm646, %v644, %v645
      %vm648 = vcmp.lt.s32.totalorder %v414, %v620
      %v649 = vsel %vm648, %v414, 2147483648
      %v650 = vsel %vm423, %v649, 2147483648
      %v651 = vrot.slane %v650, 4
      %vm652 = vcmp.gt.s32.totalorder %v650, %v651
      %v653 = vsel %vm652, %v650, %v651
      %v654 = vrot.slane %v653, 2
      %vm655 = vcmp.gt.s32.totalorder %v653, %v654
      %v656 = vsel %vm655, %v653, %v654
      %v657 = vrot.slane %v656, 1
      %vm658 = vcmp.gt.s32.totalorder %v656, %v657
      %v659 = vsel %vm658, %v656, %v657
      %vm660 = vcmp.gt.s32.totalorder %v647, %v659
      %v661 = vsel %vm660, %v647, %v659
      %vm662 = vcmp.lt.s32.totalorder %v404, %v661
      %vm663 = vcmp.lt.s32.totalorder %v405, %v661
      %vm664 = vcmp.lt.s32.totalorder %v406, %v661
      %vm665 = vcmp.lt.s32.totalorder %v407, %v661
      %v666 = vsel %vm662, %v404, 2147483648
      %v667 = vsel %vm663, %v405, 2147483648
      %v668 = vsel %vm664, %v406, 2147483648
      %v669 = vsel %vm665, %v407, 2147483648
      %v670 = vsel %vm423, %v666, 2147483648
      %v671 = vsel %vm423, %v667, 2147483648
      %v672 = vsel %vm423, %v668, 2147483648
      %v673 = vsel %vm423, %v669, 2147483648
      %vm674 = vcmp.gt.s32.totalorder %v670, %v671
      %v675 = vsel %vm674, %v670, %v671
      %vm676 = vcmp.gt.s32.totalorder %v672, %v673
      %v677 = vsel %vm676, %v672, %v673
      %vm678 = vcmp.gt.s32.totalorder %v675, %v677
      %v679 = vsel %vm678, %v675, %v677
      %v680 = vrot.slane %v679, 4
      %vm681 = vcmp.gt.s32.totalorder %v679, %v680
      %v682 = vsel %vm681, %v679, %v680
      %v683 = vrot.slane %v682, 2
      %vm684 = vcmp.gt.s32.totalorder %v682, %v683
      %v685 = vsel %vm684, %v682, %v683
      %v686 = vrot.slane %v685, 1
      %vm687 = vcmp.gt.s32.totalorder %v685, %v686
      %v688 = vsel %vm687, %v685, %v686
      %vm689 = vcmp.lt.s32.totalorder %v414, %v661
      %v690 = vsel %vm689, %v414, 2147483648
      %v691 = vsel %vm423, %v690, 2147483648
      %v692 = vrot.slane %v691, 4
      %vm693 = vcmp.gt.s32.totalorder %v691, %v692
      %v694 = vsel %vm693, %v691, %v692
      %v695 = vrot.slane %v694, 2
      %vm696 = vcmp.gt.s32.totalorder %v694, %v695
      %v697 = vsel %vm696, %v694, %v695
      %v698 = vrot.slane %v697, 1
      %vm699 = vcmp.gt.s32.totalorder %v697, %v698
      %v700 = vsel %vm699, %v697, %v698
      %vm701 = vcmp.gt.s32.totalorder %v688, %v700
      %v702 = vsel %vm701, %v688, %v700
      %vm703 = vcmp.lt.s32.totalorder %v404, %v702
      %vm704 = vcmp.lt.s32.totalorder %v405, %v702
      %vm705 = vcmp.lt.s32.totalorder %v406, %v702
      %vm706 = vcmp.lt.s32.totalorder %v407, %v702
      %v707 = vsel %vm703, %v404, 2147483648
      %v708 = vsel %vm704, %v405, 2147483648
      %v709 = vsel %vm705, %v406, 2147483648
      %v710 = vsel %vm706, %v407, 2147483648
      %v711 = vsel %vm423, %v707, 2147483648
      %v712 = vsel %vm423, %v708, 2147483648
      %v713 = vsel %vm423, %v709, 2147483648
      %v714 = vsel %vm423, %v710, 2147483648
      %vm715 = vcmp.gt.s32.totalorder %v711, %v712
      %v716 = vsel %vm715, %v711, %v712
      %vm717 = vcmp.gt.s32.totalorder %v713, %v714
      %v718 = vsel %vm717, %v713, %v714
      %vm719 = vcmp.gt.s32.totalorder %v716, %v718
      %v720 = vsel %vm719, %v716, %v718
      %v721 = vrot.slane %v720, 4
      %vm722 = vcmp.gt.s32.totalorder %v720, %v721
      %v723 = vsel %vm722, %v720, %v721
      %v724 = vrot.slane %v723, 2
      %vm725 = vcmp.gt.s32.totalorder %v723, %v724
      %v726 = vsel %vm725, %v723, %v724
      %v727 = vrot.slane %v726, 1
      %vm728 = vcmp.gt.s32.totalorder %v726, %v727
      %v729 = vsel %vm728, %v726, %v727
      %vm730 = vcmp.lt.s32.totalorder %v414, %v702
      %v731 = vsel %vm730, %v414, 2147483648
      %v732 = vsel %vm423, %v731, 2147483648
      %v733 = vrot.slane %v732, 4
      %vm734 = vcmp.gt.s32.totalorder %v732, %v733
      %v735 = vsel %vm734, %v732, %v733
      %v736 = vrot.slane %v735, 2
      %vm737 = vcmp.gt.s32.totalorder %v735, %v736
      %v738 = vsel %vm737, %v735, %v736
      %v739 = vrot.slane %v738, 1
      %vm740 = vcmp.gt.s32.totalorder %v738, %v739
      %v741 = vsel %vm740, %v738, %v739
      %vm742 = vcmp.gt.s32.totalorder %v729, %v741
      %v743 = vsel %vm742, %v729, %v741
      %vm744 = vcmask 1040384
      %v745 = vsel %vm744, %v456, %v497
      %vm746 = vcmask 1041408
      %v747 = vsel %vm746, %v745, %v538
      %vm748 = vcmask 1042432
      %v749 = vsel %vm748, %v747, %v579
      %vm750 = vcmask 1043456
      %v751 = vsel %vm750, %v749, %v620
      %vm752 = vcmask 1044480
      %v753 = vsel %vm752, %v751, %v661
      %vm754 = vcmask 1045504
      %v755 = vsel %vm754, %v753, %v702
      %vm756 = vcmask 1046528
      %v757 = vsel %vm756, %v755, %v743
      %758 = vst.msk [vmem:[#allocation2] sm:$0xff] %vm423, %v757
      // Predicated region
      $region37: #{dilated_knn_graph.1} parent=31 // pred_check
        %p759 = pneg %p408
      $region38: #{dilated_knn_graph.1} parent=31 // pred_check_branch
        %761 = sbr.rel (%p759) target = $region40
      $region39: #{dilated_knn_graph.1} parent=31 // pred_region
        %v762 = vand.u32 %v757, 31
        %v763 = vsub.s32 31, %v762
        %764 = vst.msk [vmem:[%s251] sm:$0xff] %vm423, %v763
      $region40: #{dilated_knn_graph.1} parent=31 // pred_fallthru
        _
      %p765 = scmp.lt.s32.totalorder %s19, 1
      %s766 = scalar_select %p765, %s19, 1
      %p767 = scmp.lt.s32.totalorder %s20, 0
      %s768 = scalar_select %p767, %s20, 0
      %s769 = sadd.s32 %s768, %s766
      %s770 = smul.addr %s769, 8
      %s771 = scalar_lea.vmem %s3, %s770
      // Predicated region
      $region41: #{dilated_knn_graph.1} parent=31 // pred_check
        %p772 = pneg %p133
      $region42: #{dilated_knn_graph.1} parent=31 // pred_check_branch
        %774 = sbr.rel (%p772) target = $region44
      $region43: #{dilated_knn_graph.1} parent=31 // pred_region
        _
      $region44: #{dilated_knn_graph.1} parent=31 // pred_fallthru
        _
    $region32: #{dilated_knn_graph.1} parent=5 // pred_fallthru
      _
    %p775 = scmp.le.s32.totalorder 2, %s9
    // Predicated region
    $region45: #{dilated_knn_graph.1} parent=5 // pred_check
      %p776 = pneg %p775
    $region46: #{dilated_knn_graph.1} parent=5 // pred_check_branch
      %778 = sbr.rel (%p776) target = $region48
    $region47: #{dilated_knn_graph.1} parent=5 // pred_region
      %s779 = ssub.s32 %s9, 2
      // Predicated region
      $region49: #{dilated_knn_graph.1} parent=47 // pred_check
        %p780 = pneg %p139
      $region50: #{dilated_knn_graph.1} parent=47 // pred_check_branch
        %782 = sbr.rel (%p780) target = $region52
      $region51: #{dilated_knn_graph.1} parent=47 // pred_region
        %p783 = scmp.lt.s32.totalorder %s22, 1
        %s784 = scalar_select %p783, %s22, 1
        %p785 = scmp.lt.s32.totalorder %s23, 0
        %s786 = scalar_select %p785, %s23, 0
        %s787 = sadd.s32 %s786, %s784
        %s788 = smul.addr %s787, 8
        %s789 = scalar_lea.vmem %s3, %s788
      $region52: #{dilated_knn_graph.1} parent=47 // pred_fallthru
        _
    $region48: #{dilated_knn_graph.1} parent=5 // pred_fallthru
      _
  $region6: #{dilated_knn_graph.1} parent=0 // loop_footer
    %s13 = sadd.s32 1, %s9
  $region7: #{dilated_knn_graph.1} parent=0 // loop_footer_branch
    %8 = sbr.rel target = $region3
  $region8: #{dilated_knn_graph.1} parent=0 // loop_exit
    _

</llo_original>
